<compile_context>
chip_gen: v7x
topology: tpu7x:2x2x1
jax: 0.10.0
libtpu: 0.0.40
codegen_flags: <defaults>
</compile_context>

<pallas_src>
import functools
import math

import jax
import jax.numpy as jnp
from jax.experimental import pallas as pl
from jax.experimental.pallas import tpu as pltpu

BN_EPS = 1e-5  # PyTorch BatchNorm1d default


# ---------------------------------------------------------------------------
# Per-sample scratch fill: pre-decimated, tap-shifted im2col
#   xcol[k*C_in + c, p] = x[c, p*stride + k*dil - pad]   (0 outside [0, L))
# One lane-dense row-block store per tap, executed once per sample (j == 0).
# ---------------------------------------------------------------------------
def _fill_xcol(x_ref, xcol_ref, *, C_in, stride, plan, L_out_pad):
    cd = xcol_ref.dtype
    for k, (p_min, s0, ln, src_len) in enumerate(plan):
        r0 = k * C_in
        if ln > 0:
            src = x_ref[:, s0:s0 + src_len]
            if stride > 1:
                src = src[:, ::stride]          # decimate once per sample
            pieces = []
            if p_min > 0:
                pieces.append(jnp.zeros((C_in, p_min), cd))
            pieces.append(src.astype(cd))
            tail = L_out_pad - p_min - ln
            if tail > 0:
                pieces.append(jnp.zeros((C_in, tail), cd))
            row = pieces[0] if len(pieces) == 1 else jnp.concatenate(pieces, 1)
        else:
            row = jnp.zeros((C_in, L_out_pad), cd)
        xcol_ref[r0:r0 + C_in, :] = row


# ---------------------------------------------------------------------------
# Pass 1: conv (single MXU contraction per tile) + accumulated BN statistics
# ---------------------------------------------------------------------------
def _conv_stats_kernel(x_ref, w_ref, stats_ref, xcol_ref, *,
                       C_in, TL, stride, plan, L_out_pad):
    # x_ref:    (C_in, L)        current sample (NCL read directly)
    # w_ref:    (C_out, K*C_in)  reshaped conv weight (compute_dtype)
    # stats_ref:(C_out, 2)       per-sample [sum, sum_sq], resident across j
    # xcol_ref: (K*C_in, L_out_pad) per-sample im2col scratch (compute_dtype)
    j = pl.program_id(1)

    @pl.when(j == 0)
    def _():
        _fill_xcol(x_ref, xcol_ref, C_in=C_in, stride=stride, plan=plan,
                   L_out_pad=L_out_pad)
        stats_ref[...] = jnp.zeros_like(stats_ref)

    base = pl.multiple_of(j * TL, TL)
    xcol = xcol_ref[:, pl.ds(base, TL)]              # (K*C_in, TL), contiguous
    acc = jnp.dot(w_ref[...], xcol, preferred_element_type=jnp.float32)
    # Padded lanes (>= L_out) multiply all-zero scratch columns -> exactly 0,
    # so no tail masking is needed for the statistics.
    stats_ref[:, 0:1] += jnp.sum(acc, axis=1, keepdims=True)
    stats_ref[:, 1:2] += jnp.sum(acc * acc, axis=1, keepdims=True)


# ---------------------------------------------------------------------------
# Pass 2: recomputed conv + fused BN scale/shift + ReLU (lane-dense stores)
# ---------------------------------------------------------------------------
def _conv_bn_relu_kernel(x_ref, w_ref, scale_ref, shift_ref, o_ref, xcol_ref,
                         *, C_in, TL, stride, plan, L_out_pad):
    j = pl.program_id(1)

    @pl.when(j == 0)
    def _():
        _fill_xcol(x_ref, xcol_ref, C_in=C_in, stride=stride, plan=plan,
                   L_out_pad=L_out_pad)

    base = pl.multiple_of(j * TL, TL)
    xcol = xcol_ref[:, pl.ds(base, TL)]
    acc = jnp.dot(w_ref[...], xcol, preferred_element_type=jnp.float32)
    o_ref[...] = jnp.maximum(acc * scale_ref[...] + shift_ref[...],
                             0.0).astype(o_ref.dtype)


def _vmem_limit_bytes(per_step_estimate):
    """Scoped-VMEM limit: headroom for double-buffered tiles, capped at ~3/4
    of this generation's physical VMEM (64 MiB v7x, 128 MiB v5e/v6e)."""
    try:
        cap = pltpu.get_tpu_info().vmem_capacity_bytes
    except Exception:
        cap = 64 * 1024 * 1024
    want = max(32 * 1024 * 1024, 2 * per_step_estimate)
    return int(min(3 * cap // 4, want))


def conv_block_1d(x, weight, bias, gamma, beta, *, stride=1, pad=0, dil=1,
                  lane_tile=1024, compute_dtype=jnp.bfloat16):
    """x: (N, C_in, L).  Returns (N, C_out, L_out) in x.dtype.

    compute_dtype controls the MXU operand precision (weights + im2col
    scratch); accumulation is always float32.  bfloat16 is the fast MXU path
    on every TPU generation; pass jnp.float32 for bit-tighter numerics.
    Note: `bias` is accepted for API parity but training-mode BatchNorm
    removes any per-channel constant shift exactly, so it does not affect
    the output and is not used by the kernels.
    """
    del bias  # cancels under training-mode BN (only shifts the channel mean)
    N, C_in, L = x.shape
    C_out, C_in_w, K = weight.shape
    assert C_in == C_in_w
    L_out = (L + 2 * pad - dil * (K - 1) - 1) // stride + 1
    assert L_out > 0

    # --- lane tiling of the output length (always 128-aligned tiles) ---
    L_out_128 = -(-L_out // 128) * 128
    if L_out_128 <= lane_tile:
        TL, grid_j = L_out_128, 1
    else:
        TL = max(128, (lane_tile // 128) * 128)
        grid_j = -(-L_out // TL)
    L_out_pad = grid_j * TL

    # --- static fill plan for the pre-decimated tap-shifted scratch ---
    # Only columns p < L_out are filled; the padded tail stays zero so padded
    # conv lanes are exactly zero (no stats masking needed).
    plan = []
    for k in range(K):
        a = pad - k * dil
        p_min = max(0, -((-a) // stride))                       # ceil(a/stride)
        p_max = min((L - 1 + pad - k * dil) // stride, L_out - 1)
        ln = p_max - p_min + 1
        if ln > 0:
            s0 = p_min * stride + k * dil - pad
            src_len = (ln - 1) * stride + 1
            plan.append((p_min, s0, ln, src_len))
        else:
            plan.append((0, 0, 0, 0))
    plan = tuple(plan)

    # Weight reshaped once (column index = k*C_in + c) and cast once.
    w2 = jnp.transpose(weight, (0, 2, 1)).reshape(C_out, K * C_in)
    w2 = w2.astype(compute_dtype)

    cd_b = jnp.dtype(compute_dtype).itemsize
    x_b = jnp.dtype(x.dtype).itemsize
    est = (2 * C_in * L * x_b + 2 * C_out * K * C_in * cd_b
           + 2 * C_out * TL * max(4, x_b)
           + K * C_in * L_out_pad * cd_b + 64 * C_out)
    vmem_limit = _vmem_limit_bytes(est)
    grid = (N, grid_j)
    cparams = pltpu.CompilerParams(
        dimension_semantics=("parallel", "arbitrary"),
        vmem_limit_bytes=vmem_limit)

    # ---------------- pass 1: conv + accumulated partial stats --------------
    stats = pl.pallas_call(
        functools.partial(_conv_stats_kernel, C_in=C_in, TL=TL, stride=stride,
                          plan=plan, L_out_pad=L_out_pad),
        grid=grid,
        in_specs=[
            pl.BlockSpec((pl.Squeezed(), C_in, L), lambda n, j: (n, 0, 0)),
            pl.BlockSpec((C_out, K * C_in), lambda n, j: (0, 0)),
        ],
        out_specs=pl.BlockSpec((pl.Squeezed(), C_out, 2),
                               lambda n, j: (n, 0, 0)),
        out_shape=jax.ShapeDtypeStruct((N, C_out, 2), jnp.float32),
        scratch_shapes=[pltpu.VMEM((K * C_in, L_out_pad), compute_dtype)],
        compiler_params=cparams,
    )(x, w2)

    # ---------------- tiny per-channel reduction (in JAX) -------------------
    count = float(N * L_out)
    sums = jnp.sum(stats, axis=0)                    # (C_out, 2)
    mean = sums[:, 0] / count
    # Single-pass variance in f32 (clamped); conv activations here are
    # near zero-mean so cancellation is benign for this module.
    var = jnp.maximum(sums[:, 1] / count - mean * mean, 0.0)
    inv = jax.lax.rsqrt(var + BN_EPS)
    gamma32 = gamma.astype(jnp.float32)
    beta32 = beta.astype(jnp.float32)
    scale = (gamma32 * inv).reshape(C_out, 1)
    shift = (beta32 - mean * gamma32 * inv).reshape(C_out, 1)

    # ---------------- pass 2: recomputed conv + fused BN + ReLU -------------
    y = pl.pallas_call(
        functools.partial(_conv_bn_relu_kernel, C_in=C_in, TL=TL,
                          stride=stride, plan=plan, L_out_pad=L_out_pad),
        grid=grid,
        in_specs=[
            pl.BlockSpec((pl.Squeezed(), C_in, L), lambda n, j: (n, 0, 0)),
            pl.BlockSpec((C_out, K * C_in), lambda n, j: (0, 0)),
            pl.BlockSpec((C_out, 1), lambda n, j: (0, 0)),
            pl.BlockSpec((C_out, 1), lambda n, j: (0, 0)),
        ],
        out_specs=pl.BlockSpec((pl.Squeezed(), C_out, TL),
                               lambda n, j: (n, 0, j)),
        out_shape=jax.ShapeDtypeStruct((N, C_out, L_out_pad), x.dtype),
        scratch_shapes=[pltpu.VMEM((K * C_in, L_out_pad), compute_dtype)],
        compiler_params=cparams,
    )(x, w2, scale, shift)

    if L_out_pad != L_out:
        y = y[:, :, :L_out]
    return y


# ---------------------------------------------------------------------------
# Init + pure-JAX reference (PyTorch semantics)
# ---------------------------------------------------------------------------
def init_params(key, in_channels, out_channels, kernel):
    """He-uniform init matching init_layer / init_bn."""
    n = in_channels * kernel
    std = math.sqrt(2.0 / n)
    scale = std * math.sqrt(3.0)
    weight = jax.random.uniform(
        key, (out_channels, in_channels, kernel),
        minval=-scale, maxval=scale, dtype=jnp.float32)
    bias = jnp.zeros((out_channels,), jnp.float32)   # init_layer: bias = 0
    gamma = jnp.ones((out_channels,), jnp.float32)   # init_bn: weight = 1
    beta = jnp.zeros((out_channels,), jnp.float32)   # init_bn: bias = 0
    return weight, bias, gamma, beta


def reference(x, weight, bias, gamma, beta, *, stride, pad, dil):
    """Conv1d -> BatchNorm1d (training batch stats) -> ReLU, pure JAX."""
    conv = jax.lax.conv_general_dilated(
        x, weight, window_strides=(stride,), padding=[(pad, pad)],
        rhs_dilation=(dil,), dimension_numbers=("NCH", "OIH", "NCH"))
    conv = conv + bias[None, :, None]
    mean = jnp.mean(conv, axis=(0, 2), keepdims=True)
    var = jnp.mean((conv - mean) ** 2, axis=(0, 2), keepdims=True)
    xn = (conv - mean) * jax.lax.rsqrt(var + BN_EPS)
    y = xn * gamma[None, :, None] + beta[None, :, None]
    return jnp.maximum(y, 0.0)


def _run_case(key, *, N, C_in, L, C_out, K, stride, pad, dil, lane_tile,
              compute_dtype, atol, rtol):
    kx, kw, kg, kb, kbi = jax.random.split(key, 5)
    x = jax.random.normal(kx, (N, C_in, L), dtype=jnp.float32)
    weight, bias, gamma, beta = init_params(kw, C_in, C_out, K)
    # perturb affine params / bias so BN scale/shift and bias-cancellation
    # paths are non-trivial
    gamma = gamma + 0.1 * jax.random.normal(kg, (C_out,), dtype=jnp.float32)
    beta = beta + 0.1 * jax.random.normal(kb, (C_out,), dtype=jnp.float32)
    bias = bias + 0.1 * jax.random.normal(kbi, (C_out,), dtype=jnp.float32)

    out = conv_block_1d(x, weight, bias, gamma, beta,
                        stride=stride, pad=pad, dil=dil, lane_tile=lane_tile,
                        compute_dtype=compute_dtype)
    out = jax.block_until_ready(out)

    ref = reference(x, weight, bias, gamma, beta, stride=stride, pad=pad,
                    dil=dil)
    L_out = (L + 2 * pad - dil * (K - 1) - 1) // stride + 1
    assert out.shape == ref.shape == (N, C_out, L_out)
    assert jnp.allclose(out, ref, atol=atol, rtol=rtol), "mismatch vs reference"


if __name__ == "__main__":
    key = jax.random.PRNGKey(0)
    k1, k2, k3 = jax.random.split(key, 3)

    # ConvBlock1d(4, 8, kernel=3, stride=1, pad=1, 'bn'): single 128-wide
    # lane tile, f32 MXU path (tight tolerance).
    _run_case(k1, N=2, C_in=4, L=16, C_out=8, K=3, stride=1, pad=1, dil=1,
              lane_tile=1024, compute_dtype=jnp.float32, atol=1e-4, rtol=1e-4)

    # Multi-tile path (2 lane tiles of 128, padded tail) on the default
    # bfloat16 MXU path (looser tolerance: operands are quantized to bf16,
    # accumulation stays f32).
    _run_case(k2, N=2, C_in=8, L=160, C_out=16, K=3, stride=1, pad=1, dil=1,
              lane_tile=128, compute_dtype=jnp.bfloat16, atol=4e-2, rtol=4e-2)

    # Dilated conv path, f32.
    _run_case(k3, N=2, C_in=4, L=48, C_out=8, K=3, stride=1, pad=2, dil=2,
              lane_tile=1024, compute_dtype=jnp.float32, atol=1e-4, rtol=1e-4)

    print("KERNEL_OK")
</pallas_src>

<mosaic_0001>
module attributes {stable_mosaic.version = 11 : i64} {
  func.func @_conv_stats_kernel(%arg0: i32, %arg1: i32, %arg2: memref<1x4x16xf32, #tpu.memory_space<vmem>>, %arg3: memref<8x12xf32, #tpu.memory_space<vmem>>, %arg4: memref<1x8x2xf32, #tpu.memory_space<vmem>>, %arg5: memref<12x128xf32, #tpu.memory_space<vmem>>) attributes {dimension_semantics = [#tpu.dimension_semantics<parallel>, #tpu.dimension_semantics<arbitrary>], iteration_bounds = array<i64: 2, 1>, scalar_prefetch = 0 : i64, scratch_operands = 1 : i64, tpu.core_type = #tpu.core_type<tc>, window_params = [{transform_indices = @transform_0, window_bounds = array<i64: 1, 4, 16>}, {pipeline_mode = #tpu.pipeline_mode<synchronous>, transform_indices = @transform_1, window_bounds = array<i64: 8, 12>}, {transform_indices = @transform_2, window_bounds = array<i64: 1, 8, 2>}]} {
    %c0_i32 = arith.constant 0 : i32
    %0 = arith.cmpi eq, %arg1, %c0_i32 : i32
    %1 = arith.extui %0 : i1 to i32
    %c0_i32_0 = arith.constant 0 : i32
    %2 = arith.cmpi ne, %1, %c0_i32_0 : i32
    scf.if %2 {
      %c0_16 = arith.constant 0 : index
      %c0_17 = arith.constant 0 : index
      %c0_18 = arith.constant 0 : index
      %26 = vector.load %arg2[%c0_16, %c0_17, %c0_18] : memref<1x4x16xf32, #tpu.memory_space<vmem>>, vector<1x4x15xf32>
      %27 = vector.shape_cast %26 : vector<1x4x15xf32> to vector<4x15xf32>
      %cst_19 = arith.constant 0.000000e+00 : f32
      %28 = vector.broadcast %cst_19 : f32 to vector<4x1xf32>
      %cst_20 = arith.constant 0.000000e+00 : f32
      %29 = vector.broadcast %cst_20 : f32 to vector<4x112xf32>
      %30 = tpu.concatenate %28, %27, %29 in 1 : vector<4x1xf32>, vector<4x15xf32>, vector<4x112xf32> -> vector<4x128xf32>
      %c0_21 = arith.constant 0 : index
      %c0_22 = arith.constant 0 : index
      %31 = vector.load %arg5[%c0_21, %c0_22] : memref<12x128xf32, #tpu.memory_space<vmem>>, vector<4x128xf32>
      tpu.vector_store %arg5[%c0_21, %c0_22], %30 {strides = array<i32>} : memref<12x128xf32, #tpu.memory_space<vmem>>, vector<4x128xf32>,
      %c0_23 = arith.constant 0 : index
      %c0_24 = arith.constant 0 : index
      %c0_25 = arith.constant 0 : index
      %32 = vector.load %arg2[%c0_23, %c0_24, %c0_25] : memref<1x4x16xf32, #tpu.memory_space<vmem>>, vector<1x4x16xf32>
      %33 = vector.shape_cast %32 : vector<1x4x16xf32> to vector<4x16xf32>
      %cst_26 = arith.constant 0.000000e+00 : f32
      %34 = vector.broadcast %cst_26 : f32 to vector<4x112xf32>
      %35 = tpu.concatenate %33, %34 in 1 : vector<4x16xf32>, vector<4x112xf32> -> vector<4x128xf32>
      %c4 = arith.constant 4 : index
      %c0_27 = arith.constant 0 : index
      %36 = vector.load %arg5[%c4, %c0_27] : memref<12x128xf32, #tpu.memory_space<vmem>>, vector<4x128xf32>
      tpu.vector_store %arg5[%c4, %c0_27], %35 {strides = array<i32>} : memref<12x128xf32, #tpu.memory_space<vmem>>, vector<4x128xf32>,
      %c0_28 = arith.constant 0 : index
      %c0_29 = arith.constant 0 : index
      %c1_30 = arith.constant 1 : index
      %37 = vector.load %arg2[%c0_28, %c0_29, %c1_30] : memref<1x4x16xf32, #tpu.memory_space<vmem>>, vector<1x4x15xf32>
      %38 = vector.shape_cast %37 : vector<1x4x15xf32> to vector<4x15xf32>
      %cst_31 = arith.constant 0.000000e+00 : f32
      %39 = vector.broadcast %cst_31 : f32 to vector<4x113xf32>
      %40 = tpu.concatenate %38, %39 in 1 : vector<4x15xf32>, vector<4x113xf32> -> vector<4x128xf32>
      %c8 = arith.constant 8 : index
      %c0_32 = arith.constant 0 : index
      %41 = vector.load %arg5[%c8, %c0_32] : memref<12x128xf32, #tpu.memory_space<vmem>>, vector<4x128xf32>
      tpu.vector_store %arg5[%c8, %c0_32], %40 {strides = array<i32>} : memref<12x128xf32, #tpu.memory_space<vmem>>, vector<4x128xf32>,
      %cst_33 = arith.constant 0.000000e+00 : f32
      %42 = vector.broadcast %cst_33 : f32 to vector<8x2xf32>
      %c0_34 = arith.constant 0 : index
      %c0_35 = arith.constant 0 : index
      %c0_36 = arith.constant 0 : index
      %43 = vector.load %arg4[%c0_34, %c0_35, %c0_36] : memref<1x8x2xf32, #tpu.memory_space<vmem>>, vector<1x8x2xf32>
      %44 = vector.shape_cast %43 : vector<1x8x2xf32> to vector<8x2xf32>
      %45 = vector.shape_cast %42 : vector<8x2xf32> to vector<1x8x2xf32>
      tpu.vector_store %arg4[%c0_34, %c0_35, %c0_36], %45 {strides = array<i32>} : memref<1x8x2xf32, #tpu.memory_space<vmem>>, vector<1x8x2xf32>,
    } else {
    }
    %c128_i32 = arith.constant 128 : i32
    %3 = arith.muli %arg1, %c128_i32 : i32
    %4 = tpu.assume_multiple %3, 128 : i32
    %c0 = arith.constant 0 : index
    %5 = arith.index_cast %4 : i32 to index
    %6 = vector.load %arg5[%c0, %5] : memref<12x128xf32, #tpu.memory_space<vmem>>, vector<12x128xf32>
    %c0_1 = arith.constant 0 : index
    %c0_2 = arith.constant 0 : index
    %7 = vector.load %arg3[%c0_1, %c0_2] : memref<8x12xf32, #tpu.memory_space<vmem>>, vector<8x12xf32>
    %cst = arith.constant dense<0.000000e+00> : vector<8x128xf32>
    %8 = tpu.matmul %7, %6, %cst {dimension_numbers = #tpu.dot_dimension_numbers<[1], [0], [0], [1], [0, 0, 1, 1], [], []>} : vector<8x12xf32>, vector<12x128xf32>, vector<8x128xf32> -> vector<8x128xf32>
    %c0_3 = arith.constant 0 : index
    %c0_4 = arith.constant 0 : index
    %c0_5 = arith.constant 0 : index
    %9 = vector.load %arg4[%c0_3, %c0_4, %c0_5] : memref<1x8x2xf32, #tpu.memory_space<vmem>>, vector<1x8x1xf32>
    %10 = vector.shape_cast %9 : vector<1x8x1xf32> to vector<8x1xf32>
    %cst_6 = arith.constant dense<0.000000e+00> : vector<8xf32>
    %11 = vector.multi_reduction <add>, %8, %cst_6 [1] : vector<8x128xf32> to vector<8xf32>
    %12 = vector.shape_cast %11 : vector<8xf32> to vector<8x1xf32>
    %13 = arith.addf %10, %12 : vector<8x1xf32>
    %c0_7 = arith.constant 0 : index
    %c0_8 = arith.constant 0 : index
    %c0_9 = arith.constant 0 : index
    %14 = vector.load %arg4[%c0_7, %c0_8, %c0_9] : memref<1x8x2xf32, #tpu.memory_space<vmem>>, vector<1x8x1xf32>
    %15 = vector.shape_cast %14 : vector<1x8x1xf32> to vector<8x1xf32>
    %16 = vector.shape_cast %13 : vector<8x1xf32> to vector<1x8x1xf32>
    tpu.vector_store %arg4[%c0_7, %c0_8, %c0_9], %16 {strides = array<i32>} : memref<1x8x2xf32, #tpu.memory_space<vmem>>, vector<1x8x1xf32>,
    %c0_10 = arith.constant 0 : index
    %c0_11 = arith.constant 0 : index
    %c1 = arith.constant 1 : index
    %17 = vector.load %arg4[%c0_10, %c0_11, %c1] : memref<1x8x2xf32, #tpu.memory_space<vmem>>, vector<1x8x1xf32>
    %18 = vector.shape_cast %17 : vector<1x8x1xf32> to vector<8x1xf32>
    %19 = arith.mulf %8, %8 : vector<8x128xf32>
    %cst_12 = arith.constant dense<0.000000e+00> : vector<8xf32>
    %20 = vector.multi_reduction <add>, %19, %cst_12 [1] : vector<8x128xf32> to vector<8xf32>
    %21 = vector.shape_cast %20 : vector<8xf32> to vector<8x1xf32>
    %22 = arith.addf %18, %21 : vector<8x1xf32>
    %c0_13 = arith.constant 0 : index
    %c0_14 = arith.constant 0 : index
    %c1_15 = arith.constant 1 : index
    %23 = vector.load %arg4[%c0_13, %c0_14, %c1_15] : memref<1x8x2xf32, #tpu.memory_space<vmem>>, vector<1x8x1xf32>
    %24 = vector.shape_cast %23 : vector<1x8x1xf32> to vector<8x1xf32>
    %25 = vector.shape_cast %22 : vector<8x1xf32> to vector<1x8x1xf32>
    tpu.vector_store %arg4[%c0_13, %c0_14, %c1_15], %25 {strides = array<i32>} : memref<1x8x2xf32, #tpu.memory_space<vmem>>, vector<1x8x1xf32>,
    return
  }
  func.func @transform_0(%arg0: i32, %arg1: i32) -> (i32, i32, i32) {
    %c0_i32 = arith.constant 0 : i32
    %c0_i32_0 = arith.constant 0 : i32
    %c0_i32_1 = arith.constant 0 : i32
    return %arg0, %c0_i32, %c0_i32_0 : i32, i32, i32
  }
  func.func @transform_1(%arg0: i32, %arg1: i32) -> (i32, i32) {
    %c0_i32 = arith.constant 0 : i32
    %c0_i32_0 = arith.constant 0 : i32
    %c0_i32_1 = arith.constant 0 : i32
    return %c0_i32, %c0_i32_0 : i32, i32
  }
  func.func @transform_2(%arg0: i32, %arg1: i32) -> (i32, i32, i32) {
    %c0_i32 = arith.constant 0 : i32
    %c0_i32_0 = arith.constant 0 : i32
    %c0_i32_1 = arith.constant 0 : i32
    return %arg0, %c0_i32, %c0_i32_0 : i32, i32, i32
  }
}

</mosaic_0001>

<llo_original>
// kernel: tpu_custom_call.1
$region0: #{tpu_custom_call.1}
  #allocation0 [shape = 'u32[]', space=smem, size = 0x4, offset = 0x4, fixed_abs, tag = 'smem constant byte address 0x4 - core index']
  #allocation1 [shape = 'u32[144,128]{1,0:T(1,128)}', space=vmem, size = 0x12000, scoped, tag = 'internal scratch']
  #allocation2 [shape = 'f32[12,128]{1,0:T(8,128)}', space=vmem, size = 0x2000, scoped, tag = 'scratch operand']
  %s0 = inlined_call_operand.hbm [shape: f32[2,4,16], index: 0, kind: input, shape index: {}]
  %s1 = inlined_call_operand.hbm [shape: f32[8,12], index: 1, kind: input, shape index: {}]
  %s2 = inlined_call_operand.vmem [shape: f32[2,8,2], index: 2, kind: output, shape index: {}]
  %s3 = sld [smem:[#allocation0]]
  $region53: #{tpu_custom_call.1} parent=0
    _
  %s5 = ssub.s32 1, %s3
  %s6 = scalar_select 0, %s5, %s3
  $region1: #{tpu_custom_call.1} parent=0
    #allocation3 [shape = 'u8[4096]{0}', space=vmem, size = 0x1000, scoped, tag = 'input window, operand 0']
    #allocation4 [shape = 's32[2]{0}', space=sflag, size = 0x8, scoped, tag = 'scoped memory for tpu_custom_call.1']
    #allocation5 [shape = 'u8[4096]{0}', space=vmem, size = 0x1000, scoped, tag = 'input window, operand 1, single buffered']
    #allocation6 [shape = 's32[1]{0}', space=sflag, size = 0x4, scoped, tag = 'scoped memory for tpu_custom_call.1']
    %7 = vsyncpa [#allocation4], 0
    %s8 = scalar_lea.sflag [#allocation4], 1
    %9 = vsyncpa %s8, 0
    %10 = vsyncpa [#allocation6], 0
    loop: start=0, step=1, limit=4
    $region2: #{tpu_custom_call.1} parent=1 // loop_pre_header
      _
    $region3: #{tpu_custom_call.1} parent=1 // loop_header
      %s12 = sphi 0, %s16
      %p13 = scmp.ge.s32.totalorder %s12, 4
      %s19 = sphi 0, %s31
      %s20 = sphi 0, %s27
      %s21 = sphi 0, %s19
      %s22 = sphi 0, %s20
      %s23 = sphi 0, %s21
      %s24 = sphi 0, %s22
      %s34 = sphi 0, %s36
      %s37 = sphi 0, %s34
      %s38 = sphi 0, %s37
      %s54 = sphi 0, %s38
      %s58 = sphi 0, %s58
      %s60 = sphi 0, %s58
      %s61 = sphi 0, %s60
      %s75 = sphi 0, %s61
      %s81 = sphi 0, %s83
      %s84 = sphi 0, %s81
      %s85 = sphi 0, %s84
      %s101 = sphi 0, %s85
    $region4: #{tpu_custom_call.1} parent=1 // loop_header_branch
      %15 = sbr.rel (%p13) target = $region8
    $region5: #{tpu_custom_call.1} parent=1 // loop_body
      %s17 = ssub.s32 %s12, 1
      %s18 = ssub.s32 %s12, 2
      %s25 = sadd.s32 1, %s20
      %p26 = scmp.ge.s32.totalorder %s25, 1
      %s27 = scalar_select %p26, 0, %s25
      %s28 = sadd.s32 1, %s19
      %s29 = scalar_select %p26, %s28, %s19
      %p30 = scmp.ge.s32.totalorder %s29, 2
      %s31 = scalar_select %p30, 0, %s29
      %s32 = ssub.s32 %s19, %s31
      %p33 = scmp.eq.s32.totalorder %s32, 0
      %s35 = sadd.s32 %s34, 1
      %s36 = scalar_select %p33, %s34, %s35
      %p39 = pneg %p33
      %p40 = scmp.eq.s32.totalorder %s12, 1
      %p41 = por %p39, %p40
      %p42 = scmp.ne.s32.totalorder %s34, %s37
      %p43 = scmp.eq.s32.totalorder %s12, 0
      %p44 = por %p42, %p43
      %p45 = scmp.ne.s32.totalorder %s34, %s37
      %p46 = scmp.eq.s32.totalorder %s17, 1
      %p47 = por %p45, %p46
      %p48 = scmp.ne.s32.totalorder %s37, %s38
      %p49 = scmp.eq.s32.totalorder %s17, 0
      %p50 = por %p48, %p49
      %p51 = scmp.ne.s32.totalorder %s37, %s38
      %p52 = scmp.eq.s32.totalorder %s18, 1
      %p53 = por %p51, %p52
      %p55 = scmp.ne.s32.totalorder %s38, %s54
      %p56 = scmp.eq.s32.totalorder %s18, 0
      %p57 = por %p55, %p56
      %s59 = sadd.s32 %s58, 1
      %p62 = scmp.eq.s32.totalorder %s12, 1
      %p63 = scmp.ne.s32.totalorder %s58, %s60
      %p64 = scmp.eq.s32.totalorder %s12, 0
      %p65 = por %p63, %p64
      %p66 = scmp.ne.s32.totalorder %s58, %s60
      %p67 = scmp.eq.s32.totalorder %s17, 1
      %p68 = por %p66, %p67
      %p69 = scmp.ne.s32.totalorder %s60, %s61
      %p70 = scmp.eq.s32.totalorder %s17, 0
      %p71 = por %p69, %p70
      %p72 = scmp.ne.s32.totalorder %s60, %s61
      %p73 = scmp.eq.s32.totalorder %s18, 1
      %p74 = por %p72, %p73
      %p76 = scmp.ne.s32.totalorder %s61, %s75
      %p77 = scmp.eq.s32.totalorder %s18, 0
      %p78 = por %p76, %p77
      %s79 = ssub.s32 %s19, %s31
      %p80 = scmp.eq.s32.totalorder %s79, 0
      %s82 = sadd.s32 %s81, 1
      %s83 = scalar_select %p80, %s81, %s82
      %p86 = pneg %p80
      %p87 = scmp.eq.s32.totalorder %s12, 1
      %p88 = por %p86, %p87
      %p89 = scmp.ne.s32.totalorder %s81, %s84
      %p90 = scmp.eq.s32.totalorder %s12, 0
      %p91 = por %p89, %p90
      %p92 = scmp.ne.s32.totalorder %s81, %s84
      %p93 = scmp.eq.s32.totalorder %s17, 1
      %p94 = por %p92, %p93
      %p95 = scmp.ne.s32.totalorder %s84, %s85
      %p96 = scmp.eq.s32.totalorder %s17, 0
      %p97 = por %p95, %p96
      %p98 = scmp.ne.s32.totalorder %s84, %s85
      %p99 = scmp.eq.s32.totalorder %s18, 1
      %p100 = por %p98, %p99
      %p102 = scmp.ne.s32.totalorder %s85, %s101
      %p103 = scmp.eq.s32.totalorder %s18, 0
      %p104 = por %p102, %p103
      %p105 = scmp.le.s32.totalorder 1, %s12
      %p106 = scmp.lt.s32.totalorder %s12, 3
      %p107 = pnand %p105, %p106
      %p108 = pneg %p107
      // Predicated region
      $region9: #{tpu_custom_call.1} parent=5 // pred_check
        _
      $region10: #{tpu_custom_call.1} parent=5 // pred_check_branch
        %110 = sbr.rel (%p107) target = $region12
      $region11: #{tpu_custom_call.1} parent=5 // pred_region
        %s111 = ssub.s32 %s12, 1
        // Predicated region
        $region13: #{tpu_custom_call.1} parent=11 // pred_check
          %p112 = pneg %p71
        $region14: #{tpu_custom_call.1} parent=11 // pred_check_branch
          %114 = sbr.rel (%p112) target = $region16
        $region15: #{tpu_custom_call.1} parent=11 // pred_region
          %s116 = ssub.s32 128, 128
          %117 = vsyncadd [#allocation6], %s116
          %s119 = sshll.u32 [#allocation5], 4
          %s120 = int_to_ptr.vmem [resolvable:$true] %s119
          %122 = dma.hbm_to_vmem [thread:$0]  %s1, 128, %s120, [#allocation6]
        $region16: #{tpu_custom_call.1} parent=11 // pred_fallthru
          _
      $region12: #{tpu_custom_call.1} parent=5 // pred_fallthru
        _
      %p123 = scmp.lt.s32.totalorder %s12, 2
      // Predicated region
      $region17: #{tpu_custom_call.1} parent=5 // pred_check
        %p124 = pneg %p123
      $region18: #{tpu_custom_call.1} parent=5 // pred_check_branch
        %126 = sbr.rel (%p124) target = $region20
      $region19: #{tpu_custom_call.1} parent=5 // pred_region
        // Predicated region
        $region21: #{tpu_custom_call.1} parent=19 // pred_check
          %p127 = pneg %p44
        $region22: #{tpu_custom_call.1} parent=19 // pred_check_branch
          %129 = sbr.rel (%p127) target = $region24
        $region23: #{tpu_custom_call.1} parent=19 // pred_region
          %s130 = sand.u32 %s34, 1
          %s131 = scalar_lea.sflag [#allocation4], %s130
          %s132 = sand.u32 %s34, 1
          %s133 = smul.addr %s132, 4
          %s134 = scalar_lea.vmem [#allocation3], %s133
          %s136 = ssub.s32 64, 64
          %137 = vsyncadd %s131, %s136
          %s138 = smul.addr %s19, 64
          %s139 = scalar_lea.hbm %s0, %s138
          %s141 = sshll.u32 %s134, 4
          %s142 = int_to_ptr.vmem [resolvable:$true] %s141
          %144 = dma.hbm_to_vmem [thread:$0]  %s139, 64, %s142, %s131
        $region24: #{tpu_custom_call.1} parent=19 // pred_fallthru
          _
      $region20: #{tpu_custom_call.1} parent=5 // pred_fallthru
        _
      %p145 = scmp.le.s32.totalorder 1, %s12
      %p146 = scmp.lt.s32.totalorder %s12, 3
      %p147 = pnand %p145, %p146
      %p148 = pneg %p147
      // Predicated region
      $region25: #{tpu_custom_call.1} parent=5 // pred_check
        _
      $region26: #{tpu_custom_call.1} parent=5 // pred_check_branch
        %150 = sbr.rel (%p147) target = $region28
      $region27: #{tpu_custom_call.1} parent=5 // pred_region
        %s151 = ssub.s32 %s12, 1
        %s152 = sand.u32 %s37, 1
        %s153 = scalar_lea.sflag [#allocation4], %s152
        %s154 = sand.u32 %s37, 1
        %s155 = smul.addr %s154, 4
        %s156 = scalar_lea.vmem [#allocation3], %s155
        // Predicated region
        $region29: #{tpu_custom_call.1} parent=27 // pred_check
          %p157 = pneg %p50
        $region30: #{tpu_custom_call.1} parent=27 // pred_check_branch
          %159 = sbr.rel (%p157) target = $region32
        $region31: #{tpu_custom_call.1} parent=27 // pred_region
          %160 = dma.done %s153, 64
        $region32: #{tpu_custom_call.1} parent=27 // pred_fallthru
          _
        // Predicated region
        $region33: #{tpu_custom_call.1} parent=27 // pred_check
          %p161 = pneg %p71
        $region34: #{tpu_custom_call.1} parent=27 // pred_check_branch
          %163 = sbr.rel (%p161) target = $region36
        $region35: #{tpu_custom_call.1} parent=27 // pred_region
          %164 = dma.done [#allocation6], 128
        $region36: #{tpu_custom_call.1} parent=27 // pred_fallthru
          _
        %s165 = sand.u32 %s37, 1
        %s166 = scalar_lea.sflag [#allocation4], %s165
        %s167 = sand.u32 %s37, 1
        %s168 = smul.addr %s167, 4
        %s169 = scalar_lea.vmem [#allocation3], %s168
        %p170 = pneg %p50
        %p171 = pneg %p47
        %p172 = pneg %p71
        %p173 = pneg %p68
        %p174 = pneg %p97
        %p175 = pneg %p94
        %p176 = scmp.lt.s32.totalorder %s21, 1
        %s177 = scalar_select %p176, %s21, 1
        %s178 = smul.addr %s177, 8
        %s179 = scalar_lea.vmem %s2, %s178
        %p180 = scmp.lt.s32.totalorder %s21, 1
        %s181 = scalar_select %p180, %s21, 1
        %s182 = smul.addr %s181, 8
        %s183 = scalar_lea.vmem %s2, %s182
        %p184 = scmp.eq.s32.totalorder %s22, 0
        // Predicated region
        $region37: #{tpu_custom_call.1} parent=27 // pred_check
          %p185 = pneg %p184
        $region38: #{tpu_custom_call.1} parent=27 // pred_check_branch
          %187 = sbr.rel (%p185) target = $region40
        $region39: #{tpu_custom_call.1} parent=27 // pred_region
          %v188 = vld [vmem:[%s156] sm:$0xf]
          %190 = vrot.lane.b32.xlu0 %v188, 1
          %v191 = vpop.permute.xlu0 %190
          %vm193 = vcmask 7168
          %v194 = vsel %vm193, 0.0, %v191
          %vm195 = vcmask 130048
          %v196 = vsel %vm195, %v194, 0.0
          %197 = vst [vmem:[#allocation2] sm:$0xf] %v196
          %v198 = vld [vmem:[%s156] sm:$0xf]
          %v199 = vsel %vm195, %v198, 0.0
          %200 = vst [vmem:[#allocation2 + $0x4] sm:$0xf] %v199
          %v201 = vld [vmem:[%s156] sm:$0xf]
          %203 = vrot.lane.b32.xlu0 %v201, 127
          %v204 = vpop.permute.xlu0 %203
          %vm206 = vcmask 121856
          %v207 = vsel %vm206, %v204, 0.0
          %208 = vst [vmem:[#allocation2 + $0x8] sm:$0xf] %v207
          %vm209 = vcmask 15360
          %210 = vst.msk [vmem:[%s183] sm:$0xff] %vm209, 0.0
        $region40: #{tpu_custom_call.1} parent=27 // pred_fallthru
          _
        %s211 = smul.u32 %s22, 128
        %s212 = sshra.s32 %s211, 7
        %s213 = sand.u32 %s211, 127
        %s214 = scalar_lea.vmem [#allocation2], %s212
        %v215 = vld [vmem:[%s214] sm:$0xff]
        %v216 = vld [vmem:[%s214 + $0x8] sm:$0xf]
        %v217 = vld [vmem:[#allocation5] sm:$0xff]
        %vm218 = vcmask 97280
        %v220 = vsel %vm218, %v217, 0
        %vm222 = vcmask 1043456
        %v224 = vsel %vm222, %v216, 0
        %226 = vmatprep.subr.mxu0 0.0
        %227 = vmatpush1.msra.mxu0 %v215
        %228 = vmatprep.subr.mxu0 0.0
        %229 = vmatpush1.msra.mxu0 %v224
        %230 = vmatprep.subr.mxu0 0.0
        %231 = vmatpush1.msra.mxu0 0.0
        %232 = vmatprep.subr.mxu0 0.0
        %233 = vmatpush1.msra.mxu0 0.0
        %234 = vmatprep.subr.mxu0 0.0
        %235 = vmatpush1.msra.mxu0 0.0
        %236 = vmatprep.subr.mxu0 0.0
        %237 = vmatpush1.msra.mxu0 0.0
        %238 = vmatprep.subr.mxu0 0.0
        %239 = vmatpush1.msra.mxu0 0.0
        %240 = vmatprep.subr.mxu0 0.0
        %241 = vmatpush1.msra.mxu0 0.0
        %242 = vmatprep.subr.mxu0 0.0
        %243 = vmatpush1.msra.mxu0 0.0
        %244 = vmatprep.subr.mxu0 0.0
        %245 = vmatpush1.msra.mxu0 0.0
        %246 = vmatprep.subr.mxu0 0.0
        %247 = vmatpush1.msra.mxu0 0.0
        %248 = vmatprep.subr.mxu0 0.0
        %249 = vmatpush1.msra.mxu0 0.0
        %250 = vmatprep.subr.mxu0 0.0
        %251 = vmatpush1.msra.mxu0 0.0
        %252 = vmatprep.subr.mxu0 0.0
        %253 = vmatpush1.msra.mxu0 0.0
        %254 = vmatprep.subr.mxu0 0.0
        %255 = vmatpush1.msra.mxu0 0.0
        %256 = vmatprep.subr.mxu0 0.0
        %257 = vmatpush1.msra.mxu0 0.0
        %258 = vmatprep.subr.mxu0 0.0
        %259 = vmatpush1.msra.mxu0 0.0
        %260 = vmatprep.subr.mxu0 0.0
        %261 = vmatpush1.msra.mxu0 0.0
        %262 = vmatprep.subr.mxu0 0.0
        %263 = vmatpush1.msra.mxu0 0.0
        %264 = vmatprep.subr.mxu0 0.0
        %265 = vmatpush1.msra.mxu0 0.0
        %266 = vmatprep.subr.mxu0 0.0
        %267 = vmatpush1.msra.mxu0 0.0
        %268 = vmatprep.subr.mxu0 0.0
        %269 = vmatpush1.msra.mxu0 0.0
        %270 = vmatprep.subr.mxu0 0.0
        %271 = vmatpush1.msra.mxu0 0.0
        %272 = vmatprep.subr.mxu0 0.0
        %273 = vmatpush1.msra.mxu0 0.0
        %274 = vmatprep.subr.mxu0 0.0
        %275 = vmatpush1.msra.mxu0 0.0
        %276 = vmatprep.subr.mxu0 0.0
        %277 = vmatpush1.msra.mxu0 0.0
        %278 = vmatprep.subr.mxu0 0.0
        %279 = vmatpush1.msra.mxu0 0.0
        %280 = vmatprep.subr.mxu0 0.0
        %281 = vmatpush1.msra.mxu0 0.0
        %282 = vmatprep.subr.mxu0 0.0
        %283 = vmatpush1.msra.mxu0 0.0
        %284 = vmatprep.subr.mxu0 0.0
        %285 = vmatpush1.msra.mxu0 0.0
        %286 = vmatprep.subr.mxu0 0.0
        %287 = vmatpush1.msra.mxu0 0.0
        %288 = vmatprep.subr.mxu0 0.0
        %289 = vmatpush1.msra.mxu0 0.0
        %290 = vmatprep.mubr.f32.mxu0 0.0
        %291 = vmatmul.mubr.f32.gmra.mrb[0].mxu0 %v220
        %v292 = vpop.f32.mrb[0].mxu0
        %v293 = vadd.f32 0.0, %v292
        %v294 = vpop.f32.mrb[0].mxu0
        %295 = vdwg.mxu0
        %v296 = vld [vmem:[%s183] sm:$0xff]
        %297 = vadd.xlane.f32.xlu0 %v293
        %v298 = vpop.xlane.xlu0 %297
        %v299 = vadd.f32 %v296, %v298
        %vm300 = vcmask 7168
        %301 = vst.msk [vmem:[%s183] sm:$0xff] %vm300, %v299
        %v302 = vld [vmem:[%s183] sm:$0xff]
        %v303 = vmul.f32 %v293, %v293
        %304 = vadd.xlane.f32.xlu0 %v303
        %v305 = vpop.xlane.xlu0 %304
        %v306 = vadd.f32 %v302, %v305
        %vm307 = vcmask 15368
        %308 = vst.msk [vmem:[%s183] sm:$0xff] %vm307, %v306
        %p309 = scmp.lt.s32.totalorder %s21, 1
        %s310 = scalar_select %p309, %s21, 1
        %s311 = smul.addr %s310, 8
        %s312 = scalar_lea.vmem %s2, %s311
        // Predicated region
        $region41: #{tpu_custom_call.1} parent=27 // pred_check
          %p313 = pneg %p94
        $region42: #{tpu_custom_call.1} parent=27 // pred_check_branch
          %315 = sbr.rel (%p313) target = $region44
        $region43: #{tpu_custom_call.1} parent=27 // pred_region
          _
        $region44: #{tpu_custom_call.1} parent=27 // pred_fallthru
          _
      $region28: #{tpu_custom_call.1} parent=5 // pred_fallthru
        _
      %p316 = scmp.le.s32.totalorder 2, %s12
      // Predicated region
      $region45: #{tpu_custom_call.1} parent=5 // pred_check
        %p317 = pneg %p316
      $region46: #{tpu_custom_call.1} parent=5 // pred_check_branch
        %319 = sbr.rel (%p317) target = $region48
      $region47: #{tpu_custom_call.1} parent=5 // pred_region
        %s320 = ssub.s32 %s12, 2
        // Predicated region
        $region49: #{tpu_custom_call.1} parent=47 // pred_check
          %p321 = pneg %p100
        $region50: #{tpu_custom_call.1} parent=47 // pred_check_branch
          %323 = sbr.rel (%p321) target = $region52
        $region51: #{tpu_custom_call.1} parent=47 // pred_region
          %p324 = scmp.lt.s32.totalorder %s23, 1
          %s325 = scalar_select %p324, %s23, 1
          %s326 = smul.addr %s325, 8
          %s327 = scalar_lea.vmem %s2, %s326
        $region52: #{tpu_custom_call.1} parent=47 // pred_fallthru
          _
      $region48: #{tpu_custom_call.1} parent=5 // pred_fallthru
        _
    $region6: #{tpu_custom_call.1} parent=1 // loop_footer
      %s16 = sadd.s32 1, %s12
    $region7: #{tpu_custom_call.1} parent=1 // loop_footer_branch
      %11 = sbr.rel target = $region3
    $region8: #{tpu_custom_call.1} parent=1 // loop_exit
      _
    %328 = vsyncpa [#allocation4], 1
    %s329 = scalar_lea.sflag [#allocation4], 1
    %330 = vsyncpa %s329, 1
    %331 = vsyncpa [#allocation6], 1

</llo_original>
